<compile_context>
chip_gen: v6e
topology: v6e:2x2x1
jax: 0.10.0
libtpu: 0.0.40
codegen_flags: <defaults>
</compile_context>

<pallas_src>
import functools

import jax
import jax.numpy as jnp
import numpy as np
from jax.experimental import pallas as pl
from jax.experimental.pallas import tpu as pltpu


def _update_kernel(x_full_ref, x_rows_ref, edge_ref, norm_ref, adj_ref,
                   wm_ref, wu_ref, out_ref, *, compute_dtype):
    # Block shapes:
    #   x_full_ref : [B, Np, F]   (full, VMEM-resident across row tiles)
    #   x_rows_ref : [B, tN, F]   (row tile of the same array, via BlockSpec)
    #   edge_ref   : [B, tN, F]
    #   norm_ref   : [B, tN, 1]   (f32)
    #   adj_ref    : [B, tN, Np]  (bf16 stream by default)
    #   wm_ref     : [2F, F]      (resident, already in compute_dtype)
    #   wu_ref     : [2F, F]      (resident, already in compute_dtype)
    #   out_ref    : [B, tN, F]
    B, tN, F = edge_ref.shape

    x_full = x_full_ref[...]
    x_rows = x_rows_ref[...]
    edge = edge_ref[...]
    adj = adj_ref[...]
    norm = norm_ref[...]

    # 1/norm on the EUP slot + one Newton-Raphson step on the VPU (norm >= 1).
    inv = pl.reciprocal(norm, approx=True)
    inv = inv * (2.0 - norm * inv)

    # Aggregation: batched adj @ x on the MXU, f32 accumulation.
    agg = jnp.einsum(
        "brn,bnf->brf",
        adj.astype(compute_dtype), x_full.astype(compute_dtype),
        preferred_element_type=jnp.float32,
    ) * inv                                           # [B, tN, F] f32

    # Flatten batch into M so each linear is a single MXU pass over M = B*tN.
    M = B * tN
    agg2 = agg.reshape(M, F)
    edge2 = edge.reshape(M, F)
    x2 = x_rows.reshape(M, F)

    wm = wm_ref[...]
    wu = wu_ref[...]

    def linear(lhs_a, lhs_b, w):
        if F % 128 == 0:
            # Tile-aligned concat: single K=2F MXU pass.
            lhs = jnp.concatenate([lhs_a, lhs_b], axis=-1).astype(compute_dtype)
            return jnp.dot(lhs, w, preferred_element_type=jnp.float32)
        # F < 128: avoid the XLU lane-shift a concat would need; two K=F
        # passes summed in f32 cost the same MXU time (K pads to 128 anyway).
        return (jnp.dot(lhs_a.astype(compute_dtype), w[:F, :],
                        preferred_element_type=jnp.float32)
                + jnp.dot(lhs_b.astype(compute_dtype), w[F:, :],
                          preferred_element_type=jnp.float32))

    msg = jnp.maximum(linear(agg2, edge2, wm), 0.0)    # [M, F] f32
    new = jnp.maximum(linear(x2, msg, wu), 0.0)        # [M, F] f32

    out_ref[...] = new.reshape(B, tN, F).astype(out_ref.dtype)


def _itemsize(dt):
    return jnp.dtype(dt).itemsize


def _round_down8(v):
    return max(8, (int(v) // 8) * 8)


def _vmem_capacity_bytes():
    try:
        info = pltpu.get_tpu_info()
        cap = int(getattr(info, "vmem_capacity_bytes", 0) or 0)
        if cap > 0:
            return cap
    except Exception:
        pass
    return 64 << 20   # conservative default (v7x per-TensorCore VMEM)


def update_node_embedding(x, edge, norm, adj, wm_t, wu_t, *,
                          compute_dtype=jnp.float32,
                          adj_dtype=jnp.bfloat16,
                          row_tile=None):
    """x, edge: [B,N,F]; norm: [B,N,1]; adj: [B,N,N]; wm_t, wu_t: [2F, F]
    (Linear weights stored transposed so the kernel does cat @ W^T directly).

    adj_dtype defaults to bf16: bit-exact for a 0/1 adjacency and halves the
    dominant HBM stream + VMEM tile.  Pass adj_dtype=adj.dtype to disable.
    """
    B, N, F = x.shape
    assert edge.shape == (B, N, F)
    assert norm.shape == (B, N, 1)
    assert adj.shape == (B, N, N)
    assert wm_t.shape == (2 * F, F) and wu_t.shape == (2 * F, F)

    out_dtype = x.dtype

    # ---- wrapper-side dtype staging (no per-step repacks inside the kernel).
    adj = adj.astype(adj_dtype)
    norm = norm.astype(jnp.float32)
    wm_t = wm_t.astype(compute_dtype)
    wu_t = wu_t.astype(compute_dtype)
    if jnp.dtype(compute_dtype) == jnp.dtype(jnp.bfloat16):
        x = x.astype(compute_dtype)
        edge = edge.astype(compute_dtype)

    adj_b = _itemsize(adj.dtype)
    x_b = _itemsize(x.dtype)
    edge_b = _itemsize(edge.dtype)
    out_b = _itemsize(out_dtype)
    w_b = _itemsize(wm_t.dtype)

    # ---- generation-aware row-tile selection + VMEM budget.
    vmem_cap = _vmem_capacity_bytes()
    vmem_budget = int(vmem_cap * 0.65)          # leave headroom for compiler scratch
    vmem_limit = int(vmem_cap * 0.80)

    N8 = ((N + 7) // 8) * 8
    # Resident cost (counted double-buffered to be safe): full x + both weights.
    resident = 2 * B * N8 * F * x_b + 2 * 2 * (2 * F * F * w_b)
    # Streamed cost per tile-row (double-buffered): adj row, x row, edge row,
    # norm row, out row.
    per_row = 2 * B * (N8 * adj_b + F * x_b + F * edge_b + F * out_b + 4)

    if row_tile is None:
        tile = (vmem_budget - resident) // max(per_row, 1)
        tile = _round_down8(min(tile, N8))
        # Guarantee >= 2 grid steps when possible so both v7x TensorCores get
        # work under dimension_semantics=("parallel",).
        if N8 >= 16:
            tile = min(tile, _round_down8(N8 // 2))
    else:
        tile = _round_down8(row_tile)
    tN = int(tile)

    # ---- ragged N: pad up to a multiple of the row tile (never collapse to a
    # single giant adj block).  Padded adj rows/cols are zero, padded norm is 1.
    N_pad = ((N + tN - 1) // tN) * tN
    if N_pad != N:
        p = N_pad - N
        x = jnp.pad(x, ((0, 0), (0, p), (0, 0)))
        edge = jnp.pad(edge, ((0, 0), (0, p), (0, 0)))
        adj = jnp.pad(adj, ((0, 0), (0, p), (0, p)))
        norm = jnp.pad(norm, ((0, 0), (0, p), (0, 0)), constant_values=1.0)
    n_tiles = N_pad // tN

    flops = 2 * B * N_pad * N_pad * F + 2 * (2 * B * N_pad * (2 * F) * F)
    bytes_accessed = (2 * x.size * x_b + edge.size * edge_b + norm.size * 4
                      + adj.size * adj_b + (wm_t.size + wu_t.size) * w_b
                      + B * N_pad * F * out_b)

    kernel = functools.partial(_update_kernel, compute_dtype=compute_dtype)

    out = pl.pallas_call(
        kernel,
        out_shape=jax.ShapeDtypeStruct((B, N_pad, F), out_dtype),
        grid=(n_tiles,),
        in_specs=[
            pl.BlockSpec((B, N_pad, F), lambda i: (0, 0, 0)),    # x (resident)
            pl.BlockSpec((B, tN, F), lambda i: (0, i, 0)),       # x row tile
            pl.BlockSpec((B, tN, F), lambda i: (0, i, 0)),       # edge
            pl.BlockSpec((B, tN, 1), lambda i: (0, i, 0)),       # norm
            pl.BlockSpec((B, tN, N_pad), lambda i: (0, i, 0)),   # adj (row tile)
            pl.BlockSpec((2 * F, F), lambda i: (0, 0)),          # Wm^T (resident)
            pl.BlockSpec((2 * F, F), lambda i: (0, 0)),          # Wu^T (resident)
        ],
        out_specs=pl.BlockSpec((B, tN, F), lambda i: (0, i, 0)),
        compiler_params=pltpu.CompilerParams(
            dimension_semantics=("parallel",),
            vmem_limit_bytes=vmem_limit),
        cost_estimate=pl.CostEstimate(
            flops=flops, transcendentals=B * N_pad,
            bytes_accessed=bytes_accessed),
    )(x, x, edge, norm, adj, wm_t, wu_t)

    return out[:, :N, :] if N_pad != N else out


def reference(x, edge, norm, adj, wm_t, wu_t):
    agg = jnp.matmul(adj, x) / norm
    msg = jax.nn.relu(jnp.concatenate([agg, edge], -1) @ wm_t)
    return jax.nn.relu(jnp.concatenate([x, msg], -1) @ wu_t)


if __name__ == "__main__":
    B, N, F = 2, 16, 32
    key = jax.random.PRNGKey(0)
    kx, ke, ka, kwm, kwu = jax.random.split(key, 5)

    x = jax.random.normal(kx, (B, N, F), dtype=jnp.float32)
    edge = jax.random.normal(ke, (B, N, F), dtype=jnp.float32)
    adj = (jax.random.uniform(ka, (B, N, N)) > 0.5).astype(jnp.float32)
    norm = jnp.maximum(adj.sum(-1, keepdims=True), 1.0)   # [B, N, 1]

    # nn.Linear(2F, F, bias=False) weights, stored transposed ([2F, F]).
    bound = 1.0 / np.sqrt(2 * F)
    wm_t = jax.random.uniform(kwm, (2 * F, F), minval=-bound, maxval=bound,
                              dtype=jnp.float32)
    wu_t = jax.random.uniform(kwu, (2 * F, F), minval=-bound, maxval=bound,
                              dtype=jnp.float32)

    ref = reference(x, edge, norm, adj, wm_t, wu_t)

    # Default path: f32 compute, adj streamed bf16 (bit-exact for 0/1 adj).
    out_f32 = jax.block_until_ready(
        update_node_embedding(x, edge, norm, adj, wm_t, wu_t))
    np.testing.assert_allclose(np.asarray(out_f32), np.asarray(ref),
                               rtol=1e-4, atol=1e-4)

    # Ragged-N path (pads to the row tile, slices back).
    Nr = 13
    out_ragged = jax.block_until_ready(
        update_node_embedding(x[:, :Nr], edge[:, :Nr], norm[:, :Nr],
                              adj[:, :Nr, :Nr], wm_t, wu_t))
    ref_ragged = reference(x[:, :Nr], edge[:, :Nr], norm[:, :Nr],
                           adj[:, :Nr, :Nr], wm_t, wu_t)
    np.testing.assert_allclose(np.asarray(out_ragged), np.asarray(ref_ragged),
                               rtol=1e-4, atol=1e-4)

    # Optional bf16-MXU path (f32 accumulation) -- ~3x less MXU work.
    out_bf16 = jax.block_until_ready(
        update_node_embedding(x, edge, norm, adj, wm_t, wu_t,
                              compute_dtype=jnp.bfloat16))
    np.testing.assert_allclose(np.asarray(out_bf16), np.asarray(ref),
                               rtol=2e-2, atol=2e-2)

    print("KERNEL_OK")
</pallas_src>

<mosaic_0001>
module attributes {stable_mosaic.version = 11 : i64} {
  func.func @_update_kernel(%arg0: i32, %arg1: memref<2x16x32xf32, #tpu.memory_space<vmem>>, %arg2: memref<2x8x32xf32, #tpu.memory_space<vmem>>, %arg3: memref<2x8x32xf32, #tpu.memory_space<vmem>>, %arg4: memref<2x8x1xf32, #tpu.memory_space<vmem>>, %arg5: memref<2x8x16xbf16, #tpu.memory_space<vmem>>, %arg6: memref<64x32xf32, #tpu.memory_space<vmem>>, %arg7: memref<64x32xf32, #tpu.memory_space<vmem>>, %arg8: memref<2x8x32xf32, #tpu.memory_space<vmem>>) attributes {dimension_semantics = [#tpu.dimension_semantics<parallel>], iteration_bounds = array<i64: 2>, scalar_prefetch = 0 : i64, scratch_operands = 0 : i64, tpu.core_type = #tpu.core_type<tc>, window_params = [{pipeline_mode = #tpu.pipeline_mode<synchronous>, transform_indices = @transform_0, window_bounds = array<i64: 2, 16, 32>}, {transform_indices = @transform_1, window_bounds = array<i64: 2, 8, 32>}, {transform_indices = @transform_2, window_bounds = array<i64: 2, 8, 32>}, {transform_indices = @transform_3, window_bounds = array<i64: 2, 8, 1>}, {transform_indices = @transform_4, window_bounds = array<i64: 2, 8, 16>}, {pipeline_mode = #tpu.pipeline_mode<synchronous>, transform_indices = @transform_5, window_bounds = array<i64: 64, 32>}, {pipeline_mode = #tpu.pipeline_mode<synchronous>, transform_indices = @transform_6, window_bounds = array<i64: 64, 32>}, {transform_indices = @transform_7, window_bounds = array<i64: 2, 8, 32>}]} {
    %c0 = arith.constant 0 : index
    %c0_0 = arith.constant 0 : index
    %c0_1 = arith.constant 0 : index
    %0 = vector.load %arg1[%c0, %c0_0, %c0_1] : memref<2x16x32xf32, #tpu.memory_space<vmem>>, vector<2x16x32xf32>
    %c0_2 = arith.constant 0 : index
    %c0_3 = arith.constant 0 : index
    %c0_4 = arith.constant 0 : index
    %1 = vector.load %arg2[%c0_2, %c0_3, %c0_4] : memref<2x8x32xf32, #tpu.memory_space<vmem>>, vector<2x8x32xf32>
    %c0_5 = arith.constant 0 : index
    %c0_6 = arith.constant 0 : index
    %c0_7 = arith.constant 0 : index
    %2 = vector.load %arg3[%c0_5, %c0_6, %c0_7] : memref<2x8x32xf32, #tpu.memory_space<vmem>>, vector<2x8x32xf32>
    %c0_8 = arith.constant 0 : index
    %c0_9 = arith.constant 0 : index
    %c0_10 = arith.constant 0 : index
    %3 = vector.load %arg5[%c0_8, %c0_9, %c0_10] : memref<2x8x16xbf16, #tpu.memory_space<vmem>>, vector<2x8x16xbf16>
    %c0_11 = arith.constant 0 : index
    %c0_12 = arith.constant 0 : index
    %c0_13 = arith.constant 0 : index
    %4 = vector.load %arg4[%c0_11, %c0_12, %c0_13] : memref<2x8x1xf32, #tpu.memory_space<vmem>>, vector<2x8x1xf32>
    %5 = tpu.reciprocal %4 {approx = true} : vector<2x8x1xf32> -> vector<2x8x1xf32>
    %6 = arith.mulf %4, %5 : vector<2x8x1xf32>
    %cst = arith.constant 2.000000e+00 : f32
    %7 = vector.broadcast %cst : f32 to vector<2x8x1xf32>
    %8 = arith.subf %7, %6 : vector<2x8x1xf32>
    %9 = arith.mulf %5, %8 : vector<2x8x1xf32>
    %10 = arith.extf %3 : vector<2x8x16xbf16> to vector<2x8x16xf32>
    "tpu.trace_start"() <{level = 10 : i32, message = "brn,bnf->brf"}> : () -> ()
    %cst_14 = arith.constant dense<0.000000e+00> : vector<2x8x32xf32>
    %11 = tpu.matmul %10, %0, %cst_14 {dimension_numbers = #tpu.dot_dimension_numbers<[2], [1], [1], [2], [0, 0, 0, 1, 1, 2], [0], [0]>} : vector<2x8x16xf32>, vector<2x16x32xf32>, vector<2x8x32xf32> -> vector<2x8x32xf32>
    "tpu.trace_stop"() : () -> ()
    %12 = vector.broadcast %9 : vector<2x8x1xf32> to vector<2x8x32xf32>
    %13 = arith.mulf %11, %12 : vector<2x8x32xf32>
    %14 = vector.shape_cast %13 : vector<2x8x32xf32> to vector<16x32xf32>
    %15 = vector.shape_cast %2 : vector<2x8x32xf32> to vector<16x32xf32>
    %16 = vector.shape_cast %1 : vector<2x8x32xf32> to vector<16x32xf32>
    %c0_15 = arith.constant 0 : index
    %c0_16 = arith.constant 0 : index
    %17 = vector.load %arg6[%c0_15, %c0_16] : memref<64x32xf32, #tpu.memory_space<vmem>>, vector<64x32xf32>
    %c0_17 = arith.constant 0 : index
    %c0_18 = arith.constant 0 : index
    %18 = vector.load %arg7[%c0_17, %c0_18] : memref<64x32xf32, #tpu.memory_space<vmem>>, vector<64x32xf32>
    %19 = vector.extract_strided_slice %17 {offsets = [0, 0], sizes = [32, 32], strides = [1, 1]} : vector<64x32xf32> to vector<32x32xf32>
    %cst_19 = arith.constant dense<0.000000e+00> : vector<16x32xf32>
    %20 = tpu.matmul %14, %19, %cst_19 {dimension_numbers = #tpu.dot_dimension_numbers<[1], [0], [0], [1], [0, 0, 1, 1], [], []>} : vector<16x32xf32>, vector<32x32xf32>, vector<16x32xf32> -> vector<16x32xf32>
    %21 = vector.extract_strided_slice %17 {offsets = [32, 0], sizes = [32, 32], strides = [1, 1]} : vector<64x32xf32> to vector<32x32xf32>
    %cst_20 = arith.constant dense<0.000000e+00> : vector<16x32xf32>
    %22 = tpu.matmul %15, %21, %cst_20 {dimension_numbers = #tpu.dot_dimension_numbers<[1], [0], [0], [1], [0, 0, 1, 1], [], []>} : vector<16x32xf32>, vector<32x32xf32>, vector<16x32xf32> -> vector<16x32xf32>
    %23 = arith.addf %20, %22 : vector<16x32xf32>
    %cst_21 = arith.constant 0.000000e+00 : f32
    %24 = vector.broadcast %cst_21 : f32 to vector<16x32xf32>
    %25 = arith.maximumf %23, %24 : vector<16x32xf32>
    %26 = vector.extract_strided_slice %18 {offsets = [0, 0], sizes = [32, 32], strides = [1, 1]} : vector<64x32xf32> to vector<32x32xf32>
    %cst_22 = arith.constant dense<0.000000e+00> : vector<16x32xf32>
    %27 = tpu.matmul %16, %26, %cst_22 {dimension_numbers = #tpu.dot_dimension_numbers<[1], [0], [0], [1], [0, 0, 1, 1], [], []>} : vector<16x32xf32>, vector<32x32xf32>, vector<16x32xf32> -> vector<16x32xf32>
    %28 = vector.extract_strided_slice %18 {offsets = [32, 0], sizes = [32, 32], strides = [1, 1]} : vector<64x32xf32> to vector<32x32xf32>
    %cst_23 = arith.constant dense<0.000000e+00> : vector<16x32xf32>
    %29 = tpu.matmul %25, %28, %cst_23 {dimension_numbers = #tpu.dot_dimension_numbers<[1], [0], [0], [1], [0, 0, 1, 1], [], []>} : vector<16x32xf32>, vector<32x32xf32>, vector<16x32xf32> -> vector<16x32xf32>
    %30 = arith.addf %27, %29 : vector<16x32xf32>
    %cst_24 = arith.constant 0.000000e+00 : f32
    %31 = vector.broadcast %cst_24 : f32 to vector<16x32xf32>
    %32 = arith.maximumf %30, %31 : vector<16x32xf32>
    %33 = vector.shape_cast %32 : vector<16x32xf32> to vector<2x8x32xf32>
    %c0_25 = arith.constant 0 : index
    %c0_26 = arith.constant 0 : index
    %c0_27 = arith.constant 0 : index
    %34 = vector.load %arg8[%c0_25, %c0_26, %c0_27] : memref<2x8x32xf32, #tpu.memory_space<vmem>>, vector<2x8x32xf32>
    tpu.vector_store %arg8[%c0_25, %c0_26, %c0_27], %33 {strides = array<i32>} : memref<2x8x32xf32, #tpu.memory_space<vmem>>, vector<2x8x32xf32>,
    return
  }
  func.func @transform_0(%arg0: i32) -> (i32, i32, i32) {
    %c0_i32 = arith.constant 0 : i32
    %c0_i32_0 = arith.constant 0 : i32
    %c0_i32_1 = arith.constant 0 : i32
    %c0_i32_2 = arith.constant 0 : i32
    return %c0_i32, %c0_i32_0, %c0_i32_1 : i32, i32, i32
  }
  func.func @transform_1(%arg0: i32) -> (i32, i32, i32) {
    %c0_i32 = arith.constant 0 : i32
    %c0_i32_0 = arith.constant 0 : i32
    %c0_i32_1 = arith.constant 0 : i32
    return %c0_i32, %arg0, %c0_i32_0 : i32, i32, i32
  }
  func.func @transform_2(%arg0: i32) -> (i32, i32, i32) {
    %c0_i32 = arith.constant 0 : i32
    %c0_i32_0 = arith.constant 0 : i32
    %c0_i32_1 = arith.constant 0 : i32
    return %c0_i32, %arg0, %c0_i32_0 : i32, i32, i32
  }
  func.func @transform_3(%arg0: i32) -> (i32, i32, i32) {
    %c0_i32 = arith.constant 0 : i32
    %c0_i32_0 = arith.constant 0 : i32
    %c0_i32_1 = arith.constant 0 : i32
    return %c0_i32, %arg0, %c0_i32_0 : i32, i32, i32
  }
  func.func @transform_4(%arg0: i32) -> (i32, i32, i32) {
    %c0_i32 = arith.constant 0 : i32
    %c0_i32_0 = arith.constant 0 : i32
    %c0_i32_1 = arith.constant 0 : i32
    return %c0_i32, %arg0, %c0_i32_0 : i32, i32, i32
  }
  func.func @transform_5(%arg0: i32) -> (i32, i32) {
    %c0_i32 = arith.constant 0 : i32
    %c0_i32_0 = arith.constant 0 : i32
    %c0_i32_1 = arith.constant 0 : i32
    return %c0_i32, %c0_i32_0 : i32, i32
  }
  func.func @transform_6(%arg0: i32) -> (i32, i32) {
    %c0_i32 = arith.constant 0 : i32
    %c0_i32_0 = arith.constant 0 : i32
    %c0_i32_1 = arith.constant 0 : i32
    return %c0_i32, %c0_i32_0 : i32, i32
  }
  func.func @transform_7(%arg0: i32) -> (i32, i32, i32) {
    %c0_i32 = arith.constant 0 : i32
    %c0_i32_0 = arith.constant 0 : i32
    %c0_i32_1 = arith.constant 0 : i32
    return %c0_i32, %arg0, %c0_i32_0 : i32, i32, i32
  }
}

</mosaic_0001>

<llo_original>
// kernel: tpu_custom_call.1
$region0: #{tpu_custom_call.1}
  #allocation0 [shape = 'u32[]', space=smem, size = 0x4, offset = 0x4, fixed_abs, tag = 'smem constant byte address 0x4 - core index']
  #allocation1 [shape = 'u32[144,128]{1,0:T(1,128)}', space=vmem, size = 0x12000, scoped, tag = 'internal scratch']
  %s0 = inlined_call_operand.vmem [shape: f32[2,16,32], index: 0, kind: input, shape index: {}]
  %s1 = inlined_call_operand.vmem [shape: f32[2,16,32], index: 1, kind: input, shape index: {}]
  %s2 = inlined_call_operand.vmem [shape: f32[2,16,32], index: 2, kind: input, shape index: {}]
  %s3 = inlined_call_operand.vmem [shape: f32[2,16,1], index: 3, kind: input, shape index: {}]
  %s4 = inlined_call_operand.vmem [shape: bf16[2,16,16], index: 4, kind: input, shape index: {}]
  %s5 = inlined_call_operand.vmem [shape: f32[64,32], index: 5, kind: input, shape index: {}]
  %s6 = inlined_call_operand.vmem [shape: f32[64,32], index: 6, kind: input, shape index: {}]
  %s7 = inlined_call_operand.hbm [shape: f32[2,16,32], index: 7, kind: output, shape index: {}]
  %s8 = sld [smem:[#allocation0]]
  $region216: #{tpu_custom_call.1} parent=0
    _
  %s10 = ssub.s32 1, %s8
  %s11 = scalar_select 0, %s10, %s8
  $region1: #{tpu_custom_call.1} parent=0
    #allocation2 [shape = 'u8[16384]{0}', space=vmem, size = 0x4000, scoped, tag = 'input window, operand 1']
    #allocation3 [shape = 'u8[16384]{0}', space=vmem, size = 0x4000, scoped, tag = 'input window, operand 2']
    #allocation4 [shape = 'u8[16384]{0}', space=vmem, size = 0x4000, scoped, tag = 'input window, operand 3']
    #allocation5 [shape = 'u8[8192]{0}', space=vmem, size = 0x2000, scoped, tag = 'input window, operand 4']
    #allocation6 [shape = 'u8[16384]{0}', space=vmem, size = 0x4000, scoped, tag = 'output window, operand 0']
    #allocation7 [shape = 's32[2]{0}', space=sflag, size = 0x8, scoped, tag = 'scoped memory for tpu_custom_call.1']
    %12 = vsyncpa [#allocation7], 0
    %s13 = scalar_lea.sflag [#allocation7], 1
    %14 = vsyncpa %s13, 0
    loop: start=0, step=1, limit=4
    $region2: #{tpu_custom_call.1} parent=1 // loop_pre_header
      _
    $region3: #{tpu_custom_call.1} parent=1 // loop_header
      %s16 = sphi 0, %s20
      %p17 = scmp.ge.s32.totalorder %s16, 4
      %s24 = sphi 0, %s24
      %s26 = sphi 0, %s24
      %s27 = sphi 0, %s26
      %s41 = sphi 0, %s27
      %s47 = sphi 0, %s49
      %s50 = sphi 0, %s47
      %s51 = sphi 0, %s50
      %s67 = sphi 0, %s51
      %s73 = sphi 0, %s75
      %s76 = sphi 0, %s73
      %s77 = sphi 0, %s76
      %s93 = sphi 0, %s77
      %s99 = sphi 0, %s101
      %s102 = sphi 0, %s99
      %s103 = sphi 0, %s102
      %s119 = sphi 0, %s103
      %s125 = sphi 0, %s127
      %s128 = sphi 0, %s125
      %s129 = sphi 0, %s128
      %s145 = sphi 0, %s129
      %s149 = sphi 0, %s149
      %s151 = sphi 0, %s149
      %s152 = sphi 0, %s151
      %s166 = sphi 0, %s152
      %s170 = sphi 0, %s170
      %s172 = sphi 0, %s170
      %s173 = sphi 0, %s172
      %s187 = sphi 0, %s173
      %s193 = sphi 0, %s195
      %s196 = sphi 0, %s193
      %s197 = sphi 0, %s196
      %s213 = sphi 0, %s197
    $region4: #{tpu_custom_call.1} parent=1 // loop_header_branch
      %19 = sbr.rel (%p17) target = $region8
    $region5: #{tpu_custom_call.1} parent=1 // loop_body
      %s21 = ssub.s32 %s16, 1
      %s22 = ssub.s32 %s16, 2
      %s23 = sadd.s32 %s16, 1
      %s25 = sadd.s32 %s24, 1
      %p28 = scmp.eq.s32.totalorder %s16, 1
      %p29 = scmp.ne.s32.totalorder %s24, %s26
      %p30 = scmp.eq.s32.totalorder %s16, 0
      %p31 = por %p29, %p30
      %p32 = scmp.ne.s32.totalorder %s24, %s26
      %p33 = scmp.eq.s32.totalorder %s21, 1
      %p34 = por %p32, %p33
      %p35 = scmp.ne.s32.totalorder %s26, %s27
      %p36 = scmp.eq.s32.totalorder %s21, 0
      %p37 = por %p35, %p36
      %p38 = scmp.ne.s32.totalorder %s26, %s27
      %p39 = scmp.eq.s32.totalorder %s22, 1
      %p40 = por %p38, %p39
      %p42 = scmp.ne.s32.totalorder %s27, %s41
      %p43 = scmp.eq.s32.totalorder %s22, 0
      %p44 = por %p42, %p43
      %s45 = ssub.s32 %s16, %s23
      %p46 = scmp.eq.s32.totalorder %s45, 0
      %s48 = sadd.s32 %s47, 1
      %s49 = scalar_select %p46, %s47, %s48
      %p52 = pneg %p46
      %p53 = scmp.eq.s32.totalorder %s16, 1
      %p54 = por %p52, %p53
      %p55 = scmp.ne.s32.totalorder %s47, %s50
      %p56 = scmp.eq.s32.totalorder %s16, 0
      %p57 = por %p55, %p56
      %p58 = scmp.ne.s32.totalorder %s47, %s50
      %p59 = scmp.eq.s32.totalorder %s21, 1
      %p60 = por %p58, %p59
      %p61 = scmp.ne.s32.totalorder %s50, %s51
      %p62 = scmp.eq.s32.totalorder %s21, 0
      %p63 = por %p61, %p62
      %p64 = scmp.ne.s32.totalorder %s50, %s51
      %p65 = scmp.eq.s32.totalorder %s22, 1
      %p66 = por %p64, %p65
      %p68 = scmp.ne.s32.totalorder %s51, %s67
      %p69 = scmp.eq.s32.totalorder %s22, 0
      %p70 = por %p68, %p69
      %s71 = ssub.s32 %s16, %s23
      %p72 = scmp.eq.s32.totalorder %s71, 0
      %s74 = sadd.s32 %s73, 1
      %s75 = scalar_select %p72, %s73, %s74
      %p78 = pneg %p72
      %p79 = scmp.eq.s32.totalorder %s16, 1
      %p80 = por %p78, %p79
      %p81 = scmp.ne.s32.totalorder %s73, %s76
      %p82 = scmp.eq.s32.totalorder %s16, 0
      %p83 = por %p81, %p82
      %p84 = scmp.ne.s32.totalorder %s73, %s76
      %p85 = scmp.eq.s32.totalorder %s21, 1
      %p86 = por %p84, %p85
      %p87 = scmp.ne.s32.totalorder %s76, %s77
      %p88 = scmp.eq.s32.totalorder %s21, 0
      %p89 = por %p87, %p88
      %p90 = scmp.ne.s32.totalorder %s76, %s77
      %p91 = scmp.eq.s32.totalorder %s22, 1
      %p92 = por %p90, %p91
      %p94 = scmp.ne.s32.totalorder %s77, %s93
      %p95 = scmp.eq.s32.totalorder %s22, 0
      %p96 = por %p94, %p95
      %s97 = ssub.s32 %s16, %s23
      %p98 = scmp.eq.s32.totalorder %s97, 0
      %s100 = sadd.s32 %s99, 1
      %s101 = scalar_select %p98, %s99, %s100
      %p104 = pneg %p98
      %p105 = scmp.eq.s32.totalorder %s16, 1
      %p106 = por %p104, %p105
      %p107 = scmp.ne.s32.totalorder %s99, %s102
      %p108 = scmp.eq.s32.totalorder %s16, 0
      %p109 = por %p107, %p108
      %p110 = scmp.ne.s32.totalorder %s99, %s102
      %p111 = scmp.eq.s32.totalorder %s21, 1
      %p112 = por %p110, %p111
      %p113 = scmp.ne.s32.totalorder %s102, %s103
      %p114 = scmp.eq.s32.totalorder %s21, 0
      %p115 = por %p113, %p114
      %p116 = scmp.ne.s32.totalorder %s102, %s103
      %p117 = scmp.eq.s32.totalorder %s22, 1
      %p118 = por %p116, %p117
      %p120 = scmp.ne.s32.totalorder %s103, %s119
      %p121 = scmp.eq.s32.totalorder %s22, 0
      %p122 = por %p120, %p121
      %s123 = ssub.s32 %s16, %s23
      %p124 = scmp.eq.s32.totalorder %s123, 0
      %s126 = sadd.s32 %s125, 1
      %s127 = scalar_select %p124, %s125, %s126
      %p130 = pneg %p124
      %p131 = scmp.eq.s32.totalorder %s16, 1
      %p132 = por %p130, %p131
      %p133 = scmp.ne.s32.totalorder %s125, %s128
      %p134 = scmp.eq.s32.totalorder %s16, 0
      %p135 = por %p133, %p134
      %p136 = scmp.ne.s32.totalorder %s125, %s128
      %p137 = scmp.eq.s32.totalorder %s21, 1
      %p138 = por %p136, %p137
      %p139 = scmp.ne.s32.totalorder %s128, %s129
      %p140 = scmp.eq.s32.totalorder %s21, 0
      %p141 = por %p139, %p140
      %p142 = scmp.ne.s32.totalorder %s128, %s129
      %p143 = scmp.eq.s32.totalorder %s22, 1
      %p144 = por %p142, %p143
      %p146 = scmp.ne.s32.totalorder %s129, %s145
      %p147 = scmp.eq.s32.totalorder %s22, 0
      %p148 = por %p146, %p147
      %s150 = sadd.s32 %s149, 1
      %p153 = scmp.eq.s32.totalorder %s16, 1
      %p154 = scmp.ne.s32.totalorder %s149, %s151
      %p155 = scmp.eq.s32.totalorder %s16, 0
      %p156 = por %p154, %p155
      %p157 = scmp.ne.s32.totalorder %s149, %s151
      %p158 = scmp.eq.s32.totalorder %s21, 1
      %p159 = por %p157, %p158
      %p160 = scmp.ne.s32.totalorder %s151, %s152
      %p161 = scmp.eq.s32.totalorder %s21, 0
      %p162 = por %p160, %p161
      %p163 = scmp.ne.s32.totalorder %s151, %s152
      %p164 = scmp.eq.s32.totalorder %s22, 1
      %p165 = por %p163, %p164
      %p167 = scmp.ne.s32.totalorder %s152, %s166
      %p168 = scmp.eq.s32.totalorder %s22, 0
      %p169 = por %p167, %p168
      %s171 = sadd.s32 %s170, 1
      %p174 = scmp.eq.s32.totalorder %s16, 1
      %p175 = scmp.ne.s32.totalorder %s170, %s172
      %p176 = scmp.eq.s32.totalorder %s16, 0
      %p177 = por %p175, %p176
      %p178 = scmp.ne.s32.totalorder %s170, %s172
      %p179 = scmp.eq.s32.totalorder %s21, 1
      %p180 = por %p178, %p179
      %p181 = scmp.ne.s32.totalorder %s172, %s173
      %p182 = scmp.eq.s32.totalorder %s21, 0
      %p183 = por %p181, %p182
      %p184 = scmp.ne.s32.totalorder %s172, %s173
      %p185 = scmp.eq.s32.totalorder %s22, 1
      %p186 = por %p184, %p185
      %p188 = scmp.ne.s32.totalorder %s173, %s187
      %p189 = scmp.eq.s32.totalorder %s22, 0
      %p190 = por %p188, %p189
      %s191 = ssub.s32 %s16, %s23
      %p192 = scmp.eq.s32.totalorder %s191, 0
      %s194 = sadd.s32 %s193, 1
      %s195 = scalar_select %p192, %s193, %s194
      %p198 = pneg %p192
      %p199 = scmp.eq.s32.totalorder %s16, 1
      %p200 = por %p198, %p199
      %p201 = scmp.ne.s32.totalorder %s193, %s196
      %p202 = scmp.eq.s32.totalorder %s16, 0
      %p203 = por %p201, %p202
      %p204 = scmp.ne.s32.totalorder %s193, %s196
      %p205 = scmp.eq.s32.totalorder %s21, 1
      %p206 = por %p204, %p205
      %p207 = scmp.ne.s32.totalorder %s196, %s197
      %p208 = scmp.eq.s32.totalorder %s21, 0
      %p209 = por %p207, %p208
      %p210 = scmp.ne.s32.totalorder %s196, %s197
      %p211 = scmp.eq.s32.totalorder %s22, 1
      %p212 = por %p210, %p211
      %p214 = scmp.ne.s32.totalorder %s197, %s213
      %p215 = scmp.eq.s32.totalorder %s22, 0
      %p216 = por %p214, %p215
      %p217 = scmp.le.s32.totalorder 1, %s16
      %p218 = scmp.lt.s32.totalorder %s16, 3
      %p219 = pnand %p217, %p218
      %p220 = pneg %p219
      // Predicated region
      $region9: #{tpu_custom_call.1} parent=5 // pred_check
        _
      $region10: #{tpu_custom_call.1} parent=5 // pred_check_branch
        %222 = sbr.rel (%p219) target = $region12
      $region11: #{tpu_custom_call.1} parent=5 // pred_region
        %s223 = ssub.s32 %s16, 1
        // Predicated region
        $region13: #{tpu_custom_call.1} parent=11 // pred_check
          %p224 = pneg %p37
        $region14: #{tpu_custom_call.1} parent=11 // pred_check_branch
          %226 = sbr.rel (%p224) target = $region16
        $region15: #{tpu_custom_call.1} parent=11 // pred_region
          _
        $region16: #{tpu_custom_call.1} parent=11 // pred_fallthru
          _
        // Predicated region
        $region17: #{tpu_custom_call.1} parent=11 // pred_check
          %p227 = pneg %p162
        $region18: #{tpu_custom_call.1} parent=11 // pred_check_branch
          %229 = sbr.rel (%p227) target = $region20
        $region19: #{tpu_custom_call.1} parent=11 // pred_region
          _
        $region20: #{tpu_custom_call.1} parent=11 // pred_fallthru
          _
        // Predicated region
        $region21: #{tpu_custom_call.1} parent=11 // pred_check
          %p230 = pneg %p183
        $region22: #{tpu_custom_call.1} parent=11 // pred_check_branch
          %232 = sbr.rel (%p230) target = $region24
        $region23: #{tpu_custom_call.1} parent=11 // pred_region
          _
        $region24: #{tpu_custom_call.1} parent=11 // pred_fallthru
          _
      $region12: #{tpu_custom_call.1} parent=5 // pred_fallthru
        _
      %p233 = scmp.lt.s32.totalorder %s16, 2
      // Predicated region
      $region25: #{tpu_custom_call.1} parent=5 // pred_check
        %p234 = pneg %p233
      $region26: #{tpu_custom_call.1} parent=5 // pred_check_branch
        %236 = sbr.rel (%p234) target = $region28
      $region27: #{tpu_custom_call.1} parent=5 // pred_region
        // Predicated region
        $region29: #{tpu_custom_call.1} parent=27 // pred_check
          %p237 = pneg %p57
        $region30: #{tpu_custom_call.1} parent=27 // pred_check_branch
          %239 = sbr.rel (%p237) target = $region32
        $region31: #{tpu_custom_call.1} parent=27 // pred_region
          %s240 = sand.u32 %s47, 1
          %s241 = sand.u32 %s47, 1
          %s242 = smul.addr %s241, 16
          %s243 = scalar_lea.vmem [#allocation2], %s242
          %s244 = smul.addr %s16, 8
          %s245 = scalar_lea.vmem %s1, %s244
          // Predicated region
          $region33: #{tpu_custom_call.1} parent=31 // pred_check
            _
          $region34: #{tpu_custom_call.1} parent=31 // pred_check_branch
            %247 = sbr.rel (0) target = $region36
          $region35: #{tpu_custom_call.1} parent=31 // pred_region
            // Predicated region
            $region37: #{tpu_custom_call.1} parent=35 // pred_check
              _
            $region38: #{tpu_custom_call.1} parent=35 // pred_check_branch
              %249 = sbr.rel (0) target = $region40
            $region39: #{tpu_custom_call.1} parent=35 // pred_region
              // Predicated region
              $region52: #{tpu_custom_call.1} parent=39 // pred_check
                _
              $region53: #{tpu_custom_call.1} parent=39 // pred_check_branch
                %267 = sbr.rel (0) target = $region55
              $region54: #{tpu_custom_call.1} parent=39 // pred_region
                loop: start=0, step=1, limit=1
                $region56: #{tpu_custom_call.1} parent=54 // loop_pre_header
                  _
                $region57: #{tpu_custom_call.1} parent=54 // loop_header
                  %s269 = sphi 0, %s273
                  %p270 = scmp.ge.s32.totalorder %s269, 1
                  %s274 = sphi %s245, %s245
                  %s275 = sphi %s243, %s243
                $region58: #{tpu_custom_call.1} parent=54 // loop_header_branch
                  %272 = sbr.rel (%p270) target = $region62
                $region59: #{tpu_custom_call.1} parent=54 // loop_body
                  %v276 = vld [vmem:[%s274] sm:$0xff]
                  %277 = vst [vmem:[%s275] sm:$0xff] %v276
                  %v278 = vld [vmem:[%s274 + $0x10] sm:$0xff]
                  %279 = vst [vmem:[%s275 + $0x8] sm:$0xff] %v278
                $region60: #{tpu_custom_call.1} parent=54 // loop_footer
                  %s273 = sadd.s32 1, %s269
                $region61: #{tpu_custom_call.1} parent=54 // loop_footer_branch
                  %268 = sbr.rel target = $region57
                $region62: #{tpu_custom_call.1} parent=54 // loop_exit
                  _
              $region55: #{tpu_custom_call.1} parent=39 // pred_fallthru
                _
              // Predicated region
              $region63: #{tpu_custom_call.1} parent=39 // pred_check
                _
              $region64: #{tpu_custom_call.1} parent=39 // pred_check_branch
                %281 = sbr.rel target = $region66
              $region65: #{tpu_custom_call.1} parent=39 // pred_region
                _
              $region66: #{tpu_custom_call.1} parent=39 // pred_fallthru
                _
            $region40: #{tpu_custom_call.1} parent=35 // pred_fallthru
              _
            // Predicated region
            $region41: #{tpu_custom_call.1} parent=35 // pred_check
              _
            $region42: #{tpu_custom_call.1} parent=35 // pred_check_branch
              %251 = sbr.rel target = $region44
            $region43: #{tpu_custom_call.1} parent=35 // pred_region
              %s253 = ssub.s32 256, 1
              loop: start=0, step=1, limit=1
              $region45: #{tpu_custom_call.1} parent=43 // loop_pre_header
                _
              $region46: #{tpu_custom_call.1} parent=43 // loop_header
                %s255 = sphi 0, %s259
                %p256 = scmp.ge.s32.totalorder %s255, 1
                %s260 = sphi %s245, %s245
                %s261 = sphi %s243, %s243
              $region47: #{tpu_custom_call.1} parent=43 // loop_header_branch
                %258 = sbr.rel (%p256) target = $region51
              $region48: #{tpu_custom_call.1} parent=43 // loop_body
                %v262 = vld [vmem:[%s260] sm:%s253]
                %263 = vst [vmem:[%s261] sm:%s253] %v262
                %v264 = vld [vmem:[%s260 + $0x10] sm:%s253]
                %265 = vst [vmem:[%s261 + $0x8] sm:%s253] %v264
              $region49: #{tpu_custom_call.1} parent=43 // loop_footer
                %s259 = sadd.s32 1, %s255
              $region50: #{tpu_custom_call.1} parent=43 // loop_footer_branch
                %254 = sbr.rel target = $region46
              $region51: #{tpu_custom_call.1} parent=43 // loop_exit
                _
            $region44: #{tpu_custom_call.1} parent=35 // pred_fallthru
              _
          $region36: #{tpu_custom_call.1} parent=31 // pred_fallthru
            _
          %282 = vnop
        $region32: #{tpu_custom_call.1} parent=27 // pred_fallthru
          _
        // Predicated region
        $region67: #{tpu_custom_call.1} parent=27 // pred_check
          %p283 = pneg %p83
        $region68: #{tpu_custom_call.1} parent=27 // pred_check_branch
          %285 = sbr.rel (%p283) target = $region70
        $region69: #{tpu_custom_call.1} parent=27 // pred_region
          %s286 = sand.u32 %s73, 1
          %s287 = sand.u32 %s73, 1
          %s288 = smul.addr %s287, 16
          %s289 = scalar_lea.vmem [#allocation3], %s288
          %s290 = smul.addr %s16, 8
          %s291 = scalar_lea.vmem %s2, %s290
          // Predicated region
          $region71: #{tpu_custom_call.1} parent=69 // pred_check
            _
          $region72: #{tpu_custom_call.1} parent=69 // pred_check_branch
            %293 = sbr.rel (0) target = $region74
          $region73: #{tpu_custom_call.1} parent=69 // pred_region
            // Predicated region
            $region75: #{tpu_custom_call.1} parent=73 // pred_check
              _
            $region76: #{tpu_custom_call.1} parent=73 // pred_check_branch
              %295 = sbr.rel (0) target = $region78
            $region77: #{tpu_custom_call.1} parent=73 // pred_region
              // Predicated region
              $region90: #{tpu_custom_call.1} parent=77 // pred_check
                _
              $region91: #{tpu_custom_call.1} parent=77 // pred_check_branch
                %313 = sbr.rel (0) target = $region93
              $region92: #{tpu_custom_call.1} parent=77 // pred_region
                loop: start=0, step=1, limit=1
                $region94: #{tpu_custom_call.1} parent=92 // loop_pre_header
                  _
                $region95: #{tpu_custom_call.1} parent=92 // loop_header
                  %s315 = sphi 0, %s319
                  %p316 = scmp.ge.s32.totalorder %s315, 1
                  %s320 = sphi %s291, %s291
                  %s321 = sphi %s289, %s289
                $region96: #{tpu_custom_call.1} parent=92 // loop_header_branch
                  %318 = sbr.rel (%p316) target = $region100
                $region97: #{tpu_custom_call.1} parent=92 // loop_body
                  %v322 = vld [vmem:[%s320] sm:$0xff]
                  %323 = vst [vmem:[%s321] sm:$0xff] %v322
                  %v324 = vld [vmem:[%s320 + $0x10] sm:$0xff]
                  %325 = vst [vmem:[%s321 + $0x8] sm:$0xff] %v324
                $region98: #{tpu_custom_call.1} parent=92 // loop_footer
                  %s319 = sadd.s32 1, %s315
                $region99: #{tpu_custom_call.1} parent=92 // loop_footer_branch
                  %314 = sbr.rel target = $region95
                $region100: #{tpu_custom_call.1} parent=92 // loop_exit
                  _
              $region93: #{tpu_custom_call.1} parent=77 // pred_fallthru
                _
              // Predicated region
              $region101: #{tpu_custom_call.1} parent=77 // pred_check
                _
              $region102: #{tpu_custom_call.1} parent=77 // pred_check_branch
                %327 = sbr.rel target = $region104
              $region103: #{tpu_custom_call.1} parent=77 // pred_region
                _
              $region104: #{tpu_custom_call.1} parent=77 // pred_fallthru
                _
            $region78: #{tpu_custom_call.1} parent=73 // pred_fallthru
              _
            // Predicated region
            $region79: #{tpu_custom_call.1} parent=73 // pred_check
              _
            $region80: #{tpu_custom_call.1} parent=73 // pred_check_branch
              %297 = sbr.rel target = $region82
            $region81: #{tpu_custom_call.1} parent=73 // pred_region
              %s299 = ssub.s32 256, 1
              loop: start=0, step=1, limit=1
              $region83: #{tpu_custom_call.1} parent=81 // loop_pre_header
                _
              $region84: #{tpu_custom_call.1} parent=81 // loop_header
                %s301 = sphi 0, %s305
                %p302 = scmp.ge.s32.totalorder %s301, 1
                %s306 = sphi %s291, %s291
                %s307 = sphi %s289, %s289
              $region85: #{tpu_custom_call.1} parent=81 // loop_header_branch
                %304 = sbr.rel (%p302) target = $region89
              $region86: #{tpu_custom_call.1} parent=81 // loop_body
                %v308 = vld [vmem:[%s306] sm:%s299]
                %309 = vst [vmem:[%s307] sm:%s299] %v308
                %v310 = vld [vmem:[%s306 + $0x10] sm:%s299]
                %311 = vst [vmem:[%s307 + $0x8] sm:%s299] %v310
              $region87: #{tpu_custom_call.1} parent=81 // loop_footer
                %s305 = sadd.s32 1, %s301
              $region88: #{tpu_custom_call.1} parent=81 // loop_footer_branch
                %300 = sbr.rel target = $region84
              $region89: #{tpu_custom_call.1} parent=81 // loop_exit
                _
            $region82: #{tpu_custom_call.1} parent=73 // pred_fallthru
              _
          $region74: #{tpu_custom_call.1} parent=69 // pred_fallthru
            _
          %328 = vnop
        $region70: #{tpu_custom_call.1} parent=27 // pred_fallthru
          _
        // Predicated region
        $region105: #{tpu_custom_call.1} parent=27 // pred_check
          %p329 = pneg %p109
        $region106: #{tpu_custom_call.1} parent=27 // pred_check_branch
          %331 = sbr.rel (%p329) target = $region108
        $region107: #{tpu_custom_call.1} parent=27 // pred_region
          %s332 = sand.u32 %s99, 1
          %s333 = sand.u32 %s99, 1
          %s334 = smul.addr %s333, 16
          %s335 = scalar_lea.vmem [#allocation4], %s334
          %s336 = smul.addr %s16, 8
          %s337 = scalar_lea.vmem %s3, %s336
          // Predicated region
          $region109: #{tpu_custom_call.1} parent=107 // pred_check
            _
          $region110: #{tpu_custom_call.1} parent=107 // pred_check_branch
            %339 = sbr.rel (0) target = $region112
          $region111: #{tpu_custom_call.1} parent=107 // pred_region
            // Predicated region
            $region113: #{tpu_custom_call.1} parent=111 // pred_check
              _
            $region114: #{tpu_custom_call.1} parent=111 // pred_check_branch
              %341 = sbr.rel (0) target = $region116
            $region115: #{tpu_custom_call.1} parent=111 // pred_region
              // Predicated region
              $region128: #{tpu_custom_call.1} parent=115 // pred_check
                _
              $region129: #{tpu_custom_call.1} parent=115 // pred_check_branch
                %359 = sbr.rel (0) target = $region131
              $region130: #{tpu_custom_call.1} parent=115 // pred_region
                loop: start=0, step=1, limit=1
                $region132: #{tpu_custom_call.1} parent=130 // loop_pre_header
                  _
                $region133: #{tpu_custom_call.1} parent=130 // loop_header
                  %s361 = sphi 0, %s365
                  %p362 = scmp.ge.s32.totalorder %s361, 1
                  %s366 = sphi %s337, %s337
                  %s367 = sphi %s335, %s335
                $region134: #{tpu_custom_call.1} parent=130 // loop_header_branch
                  %364 = sbr.rel (%p362) target = $region138
                $region135: #{tpu_custom_call.1} parent=130 // loop_body
                  %v368 = vld [vmem:[%s366] sm:$0xff]
                  %369 = vst [vmem:[%s367] sm:$0xff] %v368
                  %v370 = vld [vmem:[%s366 + $0x10] sm:$0xff]
                  %371 = vst [vmem:[%s367 + $0x8] sm:$0xff] %v370
                $region136: #{tpu_custom_call.1} parent=130 // loop_footer
                  %s365 = sadd.s32 1, %s361
                $region137: #{tpu_custom_call.1} parent=130 // loop_footer_branch
                  %360 = sbr.rel target = $region133
                $region138: #{tpu_custom_call.1} parent=130 // loop_exit
                  _
              $region131: #{tpu_custom_call.1} parent=115 // pred_fallthru
                _
              // Predicated region
              $region139: #{tpu_custom_call.1} parent=115 // pred_check
                _
              $region140: #{tpu_custom_call.1} parent=115 // pred_check_branch
                %373 = sbr.rel target = $region142
              $region141: #{tpu_custom_call.1} parent=115 // pred_region
                _
              $region142: #{tpu_custom_call.1} parent=115 // pred_fallthru
                _
            $region116: #{tpu_custom_call.1} parent=111 // pred_fallthru
              _
            // Predicated region
            $region117: #{tpu_custom_call.1} parent=111 // pred_check
              _
            $region118: #{tpu_custom_call.1} parent=111 // pred_check_branch
              %343 = sbr.rel target = $region120
            $region119: #{tpu_custom_call.1} parent=111 // pred_region
              %s345 = ssub.s32 256, 1
              loop: start=0, step=1, limit=1
              $region121: #{tpu_custom_call.1} parent=119 // loop_pre_header
                _
              $region122: #{tpu_custom_call.1} parent=119 // loop_header
                %s347 = sphi 0, %s351
                %p348 = scmp.ge.s32.totalorder %s347, 1
                %s352 = sphi %s337, %s337
                %s353 = sphi %s335, %s335
              $region123: #{tpu_custom_call.1} parent=119 // loop_header_branch
                %350 = sbr.rel (%p348) target = $region127
              $region124: #{tpu_custom_call.1} parent=119 // loop_body
                %v354 = vld [vmem:[%s352] sm:%s345]
                %355 = vst [vmem:[%s353] sm:%s345] %v354
                %v356 = vld [vmem:[%s352 + $0x10] sm:%s345]
                %357 = vst [vmem:[%s353 + $0x8] sm:%s345] %v356
              $region125: #{tpu_custom_call.1} parent=119 // loop_footer
                %s351 = sadd.s32 1, %s347
              $region126: #{tpu_custom_call.1} parent=119 // loop_footer_branch
                %346 = sbr.rel target = $region122
              $region127: #{tpu_custom_call.1} parent=119 // loop_exit
                _
            $region120: #{tpu_custom_call.1} parent=111 // pred_fallthru
              _
          $region112: #{tpu_custom_call.1} parent=107 // pred_fallthru
            _
          %374 = vnop
        $region108: #{tpu_custom_call.1} parent=27 // pred_fallthru
          _
        // Predicated region
        $region143: #{tpu_custom_call.1} parent=27 // pred_check
          %p375 = pneg %p135
        $region144: #{tpu_custom_call.1} parent=27 // pred_check_branch
          %377 = sbr.rel (%p375) target = $region146
        $region145: #{tpu_custom_call.1} parent=27 // pred_region
          %s378 = sand.u32 %s125, 1
          %s379 = sand.u32 %s125, 1
          %s380 = smul.addr %s379, 8
          %s381 = scalar_lea.vmem [#allocation5], %s380
          %s382 = smul.addr %s16, 4
          %s383 = scalar_lea.vmem %s4, %s382
          // Predicated region
          $region147: #{tpu_custom_call.1} parent=145 // pred_check
            _
          $region148: #{tpu_custom_call.1} parent=145 // pred_check_branch
            %385 = sbr.rel (0) target = $region150
          $region149: #{tpu_custom_call.1} parent=145 // pred_region
            // Predicated region
            $region151: #{tpu_custom_call.1} parent=149 // pred_check
              _
            $region152: #{tpu_custom_call.1} parent=149 // pred_check_branch
              %387 = sbr.rel target = $region154
            $region153: #{tpu_custom_call.1} parent=149 // pred_region
              // Predicated region
              $region166: #{tpu_custom_call.1} parent=153 // pred_check
                _
              $region167: #{tpu_custom_call.1} parent=153 // pred_check_branch
                %405 = sbr.rel (0) target = $region169
              $region168: #{tpu_custom_call.1} parent=153 // pred_region
                loop: start=0, step=1, limit=1
                $region170: #{tpu_custom_call.1} parent=168 // loop_pre_header
                  _
                $region171: #{tpu_custom_call.1} parent=168 // loop_header
                  %s407 = sphi 0, %s411
                  %p408 = scmp.ge.s32.totalorder %s407, 1
                  %s412 = sphi %s383, %s383
                  %s413 = sphi %s381, %s381
                $region172: #{tpu_custom_call.1} parent=168 // loop_header_branch
                  %410 = sbr.rel (%p408) target = $region176
                $region173: #{tpu_custom_call.1} parent=168 // loop_body
                  _
                $region174: #{tpu_custom_call.1} parent=168 // loop_footer
                  %s411 = sadd.s32 1, %s407
                $region175: #{tpu_custom_call.1} parent=168 // loop_footer_branch
                  %406 = sbr.rel target = $region171
                $region176: #{tpu_custom_call.1} parent=168 // loop_exit
                  _
                %s415 = ssub.s32 16, 1
                loop: start=0, step=1, limit=1
                $region177: #{tpu_custom_call.1} parent=168 // loop_pre_header
                  _
                $region178: #{tpu_custom_call.1} parent=168 // loop_header
                  %s417 = sphi 0, %s421
                  %p418 = scmp.ge.s32.totalorder %s417, 1
                  %s422 = sphi %s383, %s383
                  %s423 = sphi %s381, %s381
                $region179: #{tpu_custom_call.1} parent=168 // loop_header_branch
                  %420 = sbr.rel (%p418) target = $region183
                $region180: #{tpu_custom_call.1} parent=168 // loop_body
                  %v424 = vld [vmem:[%s422] sm:%s415]
                  %425 = vst [vmem:[%s423] sm:%s415] %v424
                  %v426 = vld [vmem:[%s422 + $0x8] sm:%s415]
                  %427 = vst [vmem:[%s423 + $0x4] sm:%s415] %v426
                $region181: #{tpu_custom_call.1} parent=168 // loop_footer
                  %s421 = sadd.s32 1, %s417
                $region182: #{tpu_custom_call.1} parent=168 // loop_footer_branch
                  %416 = sbr.rel target = $region178
                $region183: #{tpu_custom_call.1} parent=168 // loop_exit
                  _
              $region169: #{tpu_custom_call.1} parent=153 // pred_fallthru
                _
            $region154: #{tpu_custom_call.1} parent=149 // pred_fallthru
              _
            // Predicated region
            $region155: #{tpu_custom_call.1} parent=149 // pred_check
              _
            $region156: #{tpu_custom_call.1} parent=149 // pred_check_branch
              %389 = sbr.rel (0) target = $region158
            $region157: #{tpu_custom_call.1} parent=149 // pred_region
              %s391 = ssub.s32 16, 1
              loop: start=0, step=1, limit=1
              $region159: #{tpu_custom_call.1} parent=157 // loop_pre_header
                _
              $region160: #{tpu_custom_call.1} parent=157 // loop_header
                %s393 = sphi 0, %s397
                %p394 = scmp.ge.s32.totalorder %s393, 1
                %s398 = sphi %s383, %s383
                %s399 = sphi %s381, %s381
              $region161: #{tpu_custom_call.1} parent=157 // loop_header_branch
                %396 = sbr.rel (%p394) target = $region165
              $region162: #{tpu_custom_call.1} parent=157 // loop_body
                %v400 = vld [vmem:[%s398] sm:%s391]
                %401 = vst [vmem:[%s399] sm:%s391] %v400
                %v402 = vld [vmem:[%s398 + $0x8] sm:%s391]
                %403 = vst [vmem:[%s399 + $0x4] sm:%s391] %v402
              $region163: #{tpu_custom_call.1} parent=157 // loop_footer
                %s397 = sadd.s32 1, %s393
              $region164: #{tpu_custom_call.1} parent=157 // loop_footer_branch
                %392 = sbr.rel target = $region160
              $region165: #{tpu_custom_call.1} parent=157 // loop_exit
                _
            $region158: #{tpu_custom_call.1} parent=149 // pred_fallthru
              _
          $region150: #{tpu_custom_call.1} parent=145 // pred_fallthru
            _
          %428 = vnop
        $region146: #{tpu_custom_call.1} parent=27 // pred_fallthru
          _
      $region28: #{tpu_custom_call.1} parent=5 // pred_fallthru
        _
      %p429 = scmp.le.s32.totalorder 1, %s16
      %p430 = scmp.lt.s32.totalorder %s16, 3
      %p431 = pnand %p429, %p430
      %p432 = pneg %p431
      // Predicated region
      $region184: #{tpu_custom_call.1} parent=5 // pred_check
        _
      $region185: #{tpu_custom_call.1} parent=5 // pred_check_branch
        %434 = sbr.rel (%p431) target = $region187
      $region186: #{tpu_custom_call.1} parent=5 // pred_region
        %s435 = ssub.s32 %s16, 1
        %s436 = sand.u32 %s50, 1
        %s437 = sand.u32 %s50, 1
        %s438 = smul.addr %s437, 16
        %s439 = scalar_lea.vmem [#allocation2], %s438
        // Predicated region
        $region188: #{tpu_custom_call.1} parent=186 // pred_check
          %p440 = pneg %p63
        $region189: #{tpu_custom_call.1} parent=186 // pred_check_branch
          %442 = sbr.rel (%p440) target = $region191
        $region190: #{tpu_custom_call.1} parent=186 // pred_region
          _
        $region191: #{tpu_custom_call.1} parent=186 // pred_fallthru
          _
        %s443 = sand.u32 %s76, 1
        %s444 = sand.u32 %s76, 1
        %s445 = smul.addr %s444, 16
        %s446 = scalar_lea.vmem [#allocation3], %s445
        // Predicated region
        $region192: #{tpu_custom_call.1} parent=186 // pred_check
          %p447 = pneg %p89
        $region193: #{tpu_custom_call.1} parent=186 // pred_check_branch
          %449 = sbr.rel (%p447) target = $region195
        $region194: #{tpu_custom_call.1} parent=186 // pred_region
          _
        $region195: #{tpu_custom_call.1} parent=186 // pred_fallthru
          _
        %s450 = sand.u32 %s102, 1
        %s451 = sand.u32 %s102, 1
        %s452 = smul.addr %s451, 16
        %s453 = scalar_lea.vmem [#allocation4], %s452
        // Predicated region
        $region196: #{tpu_custom_call.1} parent=186 // pred_check
          %p454 = pneg %p115
        $region197: #{tpu_custom_call.1} parent=186 // pred_check_branch
          %456 = sbr.rel (%p454) target = $region199
        $region198: #{tpu_custom_call.1} parent=186 // pred_region
          _
        $region199: #{tpu_custom_call.1} parent=186 // pred_fallthru
          _
        %s457 = sand.u32 %s128, 1
        %s458 = sand.u32 %s128, 1
        %s459 = smul.addr %s458, 8
        %s460 = scalar_lea.vmem [#allocation5], %s459
        // Predicated region
        $region200: #{tpu_custom_call.1} parent=186 // pred_check
          %p461 = pneg %p141
        $region201: #{tpu_custom_call.1} parent=186 // pred_check_branch
          %463 = sbr.rel (%p461) target = $region203
        $region202: #{tpu_custom_call.1} parent=186 // pred_region
          _
        $region203: #{tpu_custom_call.1} parent=186 // pred_fallthru
          _
        %p464 = pneg %p37
        %p465 = pneg %p34
        %s466 = sand.u32 %s50, 1
        %s467 = sand.u32 %s50, 1
        %s468 = smul.addr %s467, 16
        %s469 = scalar_lea.vmem [#allocation2], %s468
        %p470 = pneg %p63
        %p471 = pneg %p60
        %s472 = sand.u32 %s76, 1
        %s473 = sand.u32 %s76, 1
        %s474 = smul.addr %s473, 16
        %s475 = scalar_lea.vmem [#allocation3], %s474
        %p476 = pneg %p89
        %p477 = pneg %p86
        %s478 = sand.u32 %s102, 1
        %s479 = sand.u32 %s102, 1
        %s480 = smul.addr %s479, 16
        %s481 = scalar_lea.vmem [#allocation4], %s480
        %p482 = pneg %p115
        %p483 = pneg %p112
        %s484 = sand.u32 %s128, 1
        %s485 = sand.u32 %s128, 1
        %s486 = smul.addr %s485, 8
        %s487 = scalar_lea.vmem [#allocation5], %s486
        %p488 = pneg %p141
        %p489 = pneg %p138
        %p490 = pneg %p162
        %p491 = pneg %p159
        %p492 = pneg %p183
        %p493 = pneg %p180
        %p494 = pneg %p209
        %p495 = pneg %p206
        %s496 = sand.u32 %s196, 1
        %s497 = scalar_lea.sflag [#allocation7], %s496
        %s498 = sand.u32 %s196, 1
        %s499 = smul.addr %s498, 16
        %s500 = scalar_lea.vmem [#allocation6], %s499
        %v501 = vld [vmem:[%s0] sm:$0xff]
        %v502 = vld [vmem:[%s0 + $0x8] sm:$0xff]
        %v503 = vld [vmem:[%s0 + $0x10] sm:$0xff]
        %v504 = vld [vmem:[%s0 + $0x18] sm:$0xff]
        %v505 = vld [vmem:[%s439] sm:$0xff]
        %v506 = vld [vmem:[%s439 + $0x8] sm:$0xff]
        %v507 = vld [vmem:[%s446] sm:$0xff]
        %v508 = vld [vmem:[%s446 + $0x8] sm:$0xff]
        %v509 = vld [vmem:[%s460] sm:$0xf]
        %v510 = vld [vmem:[%s460 + $0x4] sm:$0xf]
        %v511 = vld [vmem:[%s453] sm:$0xff]
        %v512 = vld [vmem:[%s453 + $0x8] sm:$0xff]
        %v513 = vrcp.pop %v511
        %v514 = vrcp.pop %v512
        %v515 = vmul.f32 %v511, %v513
        %v516 = vmul.f32 %v512, %v514
        %v517 = vsub.f32 2.0, %v515
        %v518 = vsub.f32 2.0, %v516
        %v519 = vmul.f32 %v513, %v517
        %v520 = vmul.f32 %v514, %v518
        %v521 = vunpack.c.l.bf16 %v509
        %v522 = vunpack.c.l.bf16 %v510
        %vm523 = vcmask 130048
        %v525 = vsel %vm523, %v521, 0
        %527 = vmatprep.subr.mxu0 0.0
        %528 = vmatpush1.msra.mxu0 0.0
        %529 = vmatprep.subr.mxu0 0.0
        %530 = vmatpush1.msra.mxu0 0.0
        %531 = vmatprep.subr.mxu0 0.0
        %532 = vmatpush1.msra.mxu0 0.0
        %533 = vmatprep.subr.mxu0 0.0
        %534 = vmatpush1.msra.mxu0 0.0
        %535 = vmatprep.subr.mxu0 0.0
        %536 = vmatpush1.msra.mxu0 0.0
        %537 = vmatprep.subr.mxu0 0.0
        %538 = vmatpush1.msra.mxu0 0.0
        %539 = vmatprep.subr.mxu0 0.0
        %540 = vmatpush1.msra.mxu0 0.0
        %541 = vmatprep.subr.mxu0 0.0
        %542 = vmatpush1.msra.mxu0 0.0
        %543 = vmatprep.subr.mxu0 0.0
        %544 = vmatpush1.msra.mxu0 0.0
        %545 = vmatprep.subr.mxu0 0.0
        %546 = vmatpush1.msra.mxu0 0.0
        %547 = vmatprep.subr.mxu0 0.0
        %548 = vmatpush1.msra.mxu0 0.0
        %549 = vmatprep.subr.mxu0 0.0
        %550 = vmatpush1.msra.mxu0 0.0
        %551 = vmatprep.subr.mxu0 0.0
        %552 = vmatpush1.msra.mxu0 0.0
        %553 = vmatprep.subr.mxu0 0.0
        %554 = vmatpush1.msra.mxu0 0.0
        %555 = vmatprep.subr.mxu0 0.0
        %556 = vmatpush1.msra.mxu0 %v502
        %557 = vmatprep.subr.mxu0 0.0
        %558 = vmatpush1.msra.mxu0 %v501
        %559 = vmatprep.subr.mxu0 0.0
        %560 = vmatpush2.msra.mxu0 0.0
        %561 = vmatprep.subr.mxu0 0.0
        %562 = vmatpush2.msra.mxu0 0.0
        %563 = vmatprep.subr.mxu0 0.0
        %564 = vmatpush2.msra.mxu0 0.0
        %565 = vmatprep.subr.mxu0 0.0
        %566 = vmatpush2.msra.mxu0 0.0
        %567 = vmatprep.subr.mxu0 0.0
        %568 = vmatpush2.msra.mxu0 0.0
        %569 = vmatprep.subr.mxu0 0.0
        %570 = vmatpush2.msra.mxu0 0.0
        %571 = vmatprep.subr.mxu0 0.0
        %572 = vmatpush2.msra.mxu0 0.0
        %573 = vmatprep.subr.mxu0 0.0
        %574 = vmatpush2.msra.mxu0 0.0
        %575 = vmatprep.subr.mxu0 0.0
        %576 = vmatpush2.msra.mxu0 0.0
        %577 = vmatprep.subr.mxu0 0.0
        %578 = vmatpush2.msra.mxu0 0.0
        %579 = vmatprep.subr.mxu0 0.0
        %580 = vmatpush2.msra.mxu0 0.0
        %581 = vmatprep.subr.mxu0 0.0
        %582 = vmatpush2.msra.mxu0 0.0
        %583 = vmatprep.subr.mxu0 0.0
        %584 = vmatpush2.msra.mxu0 0.0
        %585 = vmatprep.subr.mxu0 0.0
        %586 = vmatpush2.msra.mxu0 0.0
        %587 = vmatprep.subr.mxu0 0.0
        %588 = vmatpush2.msra.mxu0 0.0
        %589 = vmatprep.subr.mxu0 0.0
        %590 = vmatpush2.msra.mxu0 0.0
        %591 = vmatprep.mubr.f32.mxu0 0.0
        %592 = vmatmul.mubr.f32.gmra.mxu0 %v525
        %v593 = vpop.f32.mrf.mxu0
        %v594 = vadd.f32 0.0, %v593
        %v595 = vpop.f32.mrf.mxu0
        %596 = vdwg.mxu0
        %v598 = vsel %vm523, %v522, 0
        %600 = vmatprep.subr.mxu0 0.0
        %601 = vmatpush1.msra.mxu0 0.0
        %602 = vmatprep.subr.mxu0 0.0
        %603 = vmatpush1.msra.mxu0 0.0
        %604 = vmatprep.subr.mxu0 0.0
        %605 = vmatpush1.msra.mxu0 0.0
        %606 = vmatprep.subr.mxu0 0.0
        %607 = vmatpush1.msra.mxu0 0.0
        %608 = vmatprep.subr.mxu0 0.0
        %609 = vmatpush1.msra.mxu0 0.0
        %610 = vmatprep.subr.mxu0 0.0
        %611 = vmatpush1.msra.mxu0 0.0
        %612 = vmatprep.subr.mxu0 0.0
        %613 = vmatpush1.msra.mxu0 0.0
        %614 = vmatprep.subr.mxu0 0.0
        %615 = vmatpush1.msra.mxu0 0.0
        %616 = vmatprep.subr.mxu0 0.0
        %617 = vmatpush1.msra.mxu0 0.0
        %618 = vmatprep.subr.mxu0 0.0
        %619 = vmatpush1.msra.mxu0 0.0
        %620 = vmatprep.subr.mxu0 0.0
        %621 = vmatpush1.msra.mxu0 0.0
        %622 = vmatprep.subr.mxu0 0.0
        %623 = vmatpush1.msra.mxu0 0.0
        %624 = vmatprep.subr.mxu0 0.0
        %625 = vmatpush1.msra.mxu0 0.0
        %626 = vmatprep.subr.mxu0 0.0
        %627 = vmatpush1.msra.mxu0 0.0
        %628 = vmatprep.subr.mxu0 0.0
        %629 = vmatpush1.msra.mxu0 %v504
        %630 = vmatprep.subr.mxu0 0.0
        %631 = vmatpush1.msra.mxu0 %v503
        %632 = vmatprep.subr.mxu0 0.0
        %633 = vmatpush2.msra.mxu0 0.0
        %634 = vmatprep.subr.mxu0 0.0
        %635 = vmatpush2.msra.mxu0 0.0
        %636 = vmatprep.subr.mxu0 0.0
        %637 = vmatpush2.msra.mxu0 0.0
        %638 = vmatprep.subr.mxu0 0.0
        %639 = vmatpush2.msra.mxu0 0.0
        %640 = vmatprep.subr.mxu0 0.0
        %641 = vmatpush2.msra.mxu0 0.0
        %642 = vmatprep.subr.mxu0 0.0
        %643 = vmatpush2.msra.mxu0 0.0
        %644 = vmatprep.subr.mxu0 0.0
        %645 = vmatpush2.msra.mxu0 0.0
        %646 = vmatprep.subr.mxu0 0.0
        %647 = vmatpush2.msra.mxu0 0.0
        %648 = vmatprep.subr.mxu0 0.0
        %649 = vmatpush2.msra.mxu0 0.0
        %650 = vmatprep.subr.mxu0 0.0
        %651 = vmatpush2.msra.mxu0 0.0
        %652 = vmatprep.subr.mxu0 0.0
        %653 = vmatpush2.msra.mxu0 0.0
        %654 = vmatprep.subr.mxu0 0.0
        %655 = vmatpush2.msra.mxu0 0.0
        %656 = vmatprep.subr.mxu0 0.0
        %657 = vmatpush2.msra.mxu0 0.0
        %658 = vmatprep.subr.mxu0 0.0
        %659 = vmatpush2.msra.mxu0 0.0
        %660 = vmatprep.subr.mxu0 0.0
        %661 = vmatpush2.msra.mxu0 0.0
        %662 = vmatprep.subr.mxu0 0.0
        %663 = vmatpush2.msra.mxu0 0.0
        %664 = vmatprep.mubr.f32.mxu0 0.0
        %665 = vmatmul.mubr.f32.gmra.mxu0 %v598
        %v666 = vpop.f32.mrf.mxu0
        %v667 = vadd.f32 0.0, %v666
        %v668 = vpop.f32.mrf.mxu0
        %669 = vdwg.mxu0
        %671 = vset.pattern.permute.xlu0 0
        %672 = vperm.xlu0 %671, %v519
        %v673 = vpop.permute.xlu0 %672
        %676 = vset.pattern.permute.xlu0 0
        %677 = vperm.xlu0 %676, %v520
        %v678 = vpop.permute.xlu0 %677
        %v680 = vmul.f32 %v594, %v673
        %v681 = vmul.f32 %v667, %v678
        %v682 = vld [vmem:[%s5] sm:$0xff]
        %v683 = vld [vmem:[%s5 + $0x8] sm:$0xff]
        %v684 = vld [vmem:[%s5 + $0x10] sm:$0xff]
        %v685 = vld [vmem:[%s5 + $0x18] sm:$0xff]
        %v686 = vld [vmem:[%s5 + $0x20] sm:$0xff]
        %v687 = vld [vmem:[%s5 + $0x28] sm:$0xff]
        %v688 = vld [vmem:[%s5 + $0x30] sm:$0xff]
        %v689 = vld [vmem:[%s5 + $0x38] sm:$0xff]
        %v690 = vld [vmem:[%s6] sm:$0xff]
        %v691 = vld [vmem:[%s6 + $0x8] sm:$0xff]
        %v692 = vld [vmem:[%s6 + $0x10] sm:$0xff]
        %v693 = vld [vmem:[%s6 + $0x18] sm:$0xff]
        %v694 = vld [vmem:[%s6 + $0x20] sm:$0xff]
        %v695 = vld [vmem:[%s6 + $0x28] sm:$0xff]
        %v696 = vld [vmem:[%s6 + $0x30] sm:$0xff]
        %v697 = vld [vmem:[%s6 + $0x38] sm:$0xff]
        %vm698 = vcmask 261120
        %v700 = vsel %vm698, %v507, 0
        %v703 = vsel %vm698, %v508, 0
        %705 = vmatprep.subr.mxu0 0.0
        %706 = vmatpush1.msra.mxu0 0.0
        %707 = vmatprep.subr.mxu0 0.0
        %708 = vmatpush1.msra.mxu0 0.0
        %709 = vmatprep.subr.mxu0 0.0
        %710 = vmatpush1.msra.mxu0 0.0
        %711 = vmatprep.subr.mxu0 0.0
        %712 = vmatpush1.msra.mxu0 0.0
        %713 = vmatprep.subr.mxu0 0.0
        %714 = vmatpush1.msra.mxu0 0.0
        %715 = vmatprep.subr.mxu0 0.0
        %716 = vmatpush1.msra.mxu0 0.0
        %717 = vmatprep.subr.mxu0 0.0
        %718 = vmatpush1.msra.mxu0 0.0
        %719 = vmatprep.subr.mxu0 0.0
        %720 = vmatpush1.msra.mxu0 0.0
        %721 = vmatprep.subr.mxu0 0.0
        %722 = vmatpush1.msra.mxu0 0.0
        %723 = vmatprep.subr.mxu0 0.0
        %724 = vmatpush1.msra.mxu0 0.0
        %725 = vmatprep.subr.mxu0 0.0
        %726 = vmatpush1.msra.mxu0 0.0
        %727 = vmatprep.subr.mxu0 0.0
        %728 = vmatpush1.msra.mxu0 0.0
        %729 = vmatprep.subr.mxu0 0.0
        %730 = vmatpush1.msra.mxu0 %v689
        %731 = vmatprep.subr.mxu0 0.0
        %732 = vmatpush1.msra.mxu0 %v688
        %733 = vmatprep.subr.mxu0 0.0
        %734 = vmatpush1.msra.mxu0 %v687
        %735 = vmatprep.subr.mxu0 0.0
        %736 = vmatpush1.msra.mxu0 %v686
        %737 = vmatprep.subr.mxu0 0.0
        %738 = vmatpush2.msra.mxu0 0.0
        %739 = vmatprep.subr.mxu0 0.0
        %740 = vmatpush2.msra.mxu0 0.0
        %741 = vmatprep.subr.mxu0 0.0
        %742 = vmatpush2.msra.mxu0 0.0
        %743 = vmatprep.subr.mxu0 0.0
        %744 = vmatpush2.msra.mxu0 0.0
        %745 = vmatprep.subr.mxu0 0.0
        %746 = vmatpush2.msra.mxu0 0.0
        %747 = vmatprep.subr.mxu0 0.0
        %748 = vmatpush2.msra.mxu0 0.0
        %749 = vmatprep.subr.mxu0 0.0
        %750 = vmatpush2.msra.mxu0 0.0
        %751 = vmatprep.subr.mxu0 0.0
        %752 = vmatpush2.msra.mxu0 0.0
        %753 = vmatprep.subr.mxu0 0.0
        %754 = vmatpush2.msra.mxu0 0.0
        %755 = vmatprep.subr.mxu0 0.0
        %756 = vmatpush2.msra.mxu0 0.0
        %757 = vmatprep.subr.mxu0 0.0
        %758 = vmatpush2.msra.mxu0 0.0
        %759 = vmatprep.subr.mxu0 0.0
        %760 = vmatpush2.msra.mxu0 0.0
        %761 = vmatprep.subr.mxu0 0.0
        %762 = vmatpush2.msra.mxu0 0.0
        %763 = vmatprep.subr.mxu0 0.0
        %764 = vmatpush2.msra.mxu0 0.0
        %765 = vmatprep.subr.mxu0 0.0
        %766 = vmatpush2.msra.mxu0 0.0
        %767 = vmatprep.subr.mxu0 0.0
        %768 = vmatpush2.msra.mxu0 0.0
        %769 = vmatprep.mubr.f32.mxu0 0.0
        %770 = vmatmul.mubr.f32.gmra.mxu0 %v700
        %v771 = vpop.f32.mrf.mxu0
        %v772 = vadd.f32 0.0, %v771
        %v773 = vpop.f32.mrf.mxu0
        %774 = vmatprep.mubr.f32.mxu0 0.0
        %775 = vmatmul.mubr.f32.gmra.mxu0 %v703
        %v776 = vpop.f32.mrf.mxu0
        %v777 = vadd.f32 0.0, %v776
        %v778 = vpop.f32.mrf.mxu0
        %779 = vdwg.mxu0
        %v781 = vsel %vm698, %v680, 0
        %v784 = vsel %vm698, %v681, 0
        %786 = vmatprep.subr.mxu0 0.0
        %787 = vmatpush1.msra.mxu0 0.0
        %788 = vmatprep.subr.mxu0 0.0
        %789 = vmatpush1.msra.mxu0 0.0
        %790 = vmatprep.subr.mxu0 0.0
        %791 = vmatpush1.msra.mxu0 0.0
        %792 = vmatprep.subr.mxu0 0.0
        %793 = vmatpush1.msra.mxu0 0.0
        %794 = vmatprep.subr.mxu0 0.0
        %795 = vmatpush1.msra.mxu0 0.0
        %796 = vmatprep.subr.mxu0 0.0
        %797 = vmatpush1.msra.mxu0 0.0
        %798 = vmatprep.subr.mxu0 0.0
        %799 = vmatpush1.msra.mxu0 0.0
        %800 = vmatprep.subr.mxu0 0.0
        %801 = vmatpush1.msra.mxu0 0.0
        %802 = vmatprep.subr.mxu0 0.0
        %803 = vmatpush1.msra.mxu0 0.0
        %804 = vmatprep.subr.mxu0 0.0
        %805 = vmatpush1.msra.mxu0 0.0
        %806 = vmatprep.subr.mxu0 0.0
        %807 = vmatpush1.msra.mxu0 0.0
        %808 = vmatprep.subr.mxu0 0.0
        %809 = vmatpush1.msra.mxu0 0.0
        %810 = vmatprep.subr.mxu0 0.0
        %811 = vmatpush1.msra.mxu0 %v685
        %812 = vmatprep.subr.mxu0 0.0
        %813 = vmatpush1.msra.mxu0 %v684
        %814 = vmatprep.subr.mxu0 0.0
        %815 = vmatpush1.msra.mxu0 %v683
        %816 = vmatprep.subr.mxu0 0.0
        %817 = vmatpush1.msra.mxu0 %v682
        %818 = vmatprep.subr.mxu0 0.0
        %819 = vmatpush2.msra.mxu0 0.0
        %820 = vmatprep.subr.mxu0 0.0
        %821 = vmatpush2.msra.mxu0 0.0
        %822 = vmatprep.subr.mxu0 0.0
        %823 = vmatpush2.msra.mxu0 0.0
        %824 = vmatprep.subr.mxu0 0.0
        %825 = vmatpush2.msra.mxu0 0.0
        %826 = vmatprep.subr.mxu0 0.0
        %827 = vmatpush2.msra.mxu0 0.0
        %828 = vmatprep.subr.mxu0 0.0
        %829 = vmatpush2.msra.mxu0 0.0
        %830 = vmatprep.subr.mxu0 0.0
        %831 = vmatpush2.msra.mxu0 0.0
        %832 = vmatprep.subr.mxu0 0.0
        %833 = vmatpush2.msra.mxu0 0.0
        %834 = vmatprep.subr.mxu0 0.0
        %835 = vmatpush2.msra.mxu0 0.0
        %836 = vmatprep.subr.mxu0 0.0
        %837 = vmatpush2.msra.mxu0 0.0
        %838 = vmatprep.subr.mxu0 0.0
        %839 = vmatpush2.msra.mxu0 0.0
        %840 = vmatprep.subr.mxu0 0.0
        %841 = vmatpush2.msra.mxu0 0.0
        %842 = vmatprep.subr.mxu0 0.0
        %843 = vmatpush2.msra.mxu0 0.0
        %844 = vmatprep.subr.mxu0 0.0
        %845 = vmatpush2.msra.mxu0 0.0
        %846 = vmatprep.subr.mxu0 0.0
        %847 = vmatpush2.msra.mxu0 0.0
        %848 = vmatprep.subr.mxu0 0.0
        %849 = vmatpush2.msra.mxu0 0.0
        %850 = vmatprep.mubr.f32.mxu0 0.0
        %851 = vmatmul.mubr.f32.gmra.mxu0 %v781
        %v852 = vpop.f32.mrf.mxu0
        %v853 = vadd.f32 %v772, %v852
        %v854 = vpop.f32.mrf.mxu0
        %855 = vmatprep.mubr.f32.mxu0 0.0
        %856 = vmatmul.mubr.f32.gmra.mxu0 %v784
        %v857 = vpop.f32.mrf.mxu0
        %v858 = vadd.f32 %v777, %v857
        %v859 = vpop.f32.mrf.mxu0
        %860 = vdwg.mxu0
        %v861 = vmax.f32 %v853, 0.0
        %v862 = vmax.f32 %v858, 0.0
        %v864 = vsel %vm698, %v861, 0
        %v867 = vsel %vm698, %v862, 0
        %869 = vmatprep.subr.mxu0 0.0
        %870 = vmatpush1.msra.mxu0 0.0
        %871 = vmatprep.subr.mxu0 0.0
        %872 = vmatpush1.msra.mxu0 0.0
        %873 = vmatprep.subr.mxu0 0.0
        %874 = vmatpush1.msra.mxu0 0.0
        %875 = vmatprep.subr.mxu0 0.0
        %876 = vmatpush1.msra.mxu0 0.0
        %877 = vmatprep.subr.mxu0 0.0
        %878 = vmatpush1.msra.mxu0 0.0
        %879 = vmatprep.subr.mxu0 0.0
        %880 = vmatpush1.msra.mxu0 0.0
        %881 = vmatprep.subr.mxu0 0.0
        %882 = vmatpush1.msra.mxu0 0.0
        %883 = vmatprep.subr.mxu0 0.0
        %884 = vmatpush1.msra.mxu0 0.0
        %885 = vmatprep.subr.mxu0 0.0
        %886 = vmatpush1.msra.mxu0 0.0
        %887 = vmatprep.subr.mxu0 0.0
        %888 = vmatpush1.msra.mxu0 0.0
        %889 = vmatprep.subr.mxu0 0.0
        %890 = vmatpush1.msra.mxu0 0.0
        %891 = vmatprep.subr.mxu0 0.0
        %892 = vmatpush1.msra.mxu0 0.0
        %893 = vmatprep.subr.mxu0 0.0
        %894 = vmatpush1.msra.mxu0 %v697
        %895 = vmatprep.subr.mxu0 0.0
        %896 = vmatpush1.msra.mxu0 %v696
        %897 = vmatprep.subr.mxu0 0.0
        %898 = vmatpush1.msra.mxu0 %v695
        %899 = vmatprep.subr.mxu0 0.0
        %900 = vmatpush1.msra.mxu0 %v694
        %901 = vmatprep.subr.mxu0 0.0
        %902 = vmatpush2.msra.mxu0 0.0
        %903 = vmatprep.subr.mxu0 0.0
        %904 = vmatpush2.msra.mxu0 0.0
        %905 = vmatprep.subr.mxu0 0.0
        %906 = vmatpush2.msra.mxu0 0.0
        %907 = vmatprep.subr.mxu0 0.0
        %908 = vmatpush2.msra.mxu0 0.0
        %909 = vmatprep.subr.mxu0 0.0
        %910 = vmatpush2.msra.mxu0 0.0
        %911 = vmatprep.subr.mxu0 0.0
        %912 = vmatpush2.msra.mxu0 0.0
        %913 = vmatprep.subr.mxu0 0.0
        %914 = vmatpush2.msra.mxu0 0.0
        %915 = vmatprep.subr.mxu0 0.0
        %916 = vmatpush2.msra.mxu0 0.0
        %917 = vmatprep.subr.mxu0 0.0
        %918 = vmatpush2.msra.mxu0 0.0
        %919 = vmatprep.subr.mxu0 0.0
        %920 = vmatpush2.msra.mxu0 0.0
        %921 = vmatprep.subr.mxu0 0.0
        %922 = vmatpush2.msra.mxu0 0.0
        %923 = vmatprep.subr.mxu0 0.0
        %924 = vmatpush2.msra.mxu0 0.0
        %925 = vmatprep.subr.mxu0 0.0
        %926 = vmatpush2.msra.mxu0 0.0
        %927 = vmatprep.subr.mxu0 0.0
        %928 = vmatpush2.msra.mxu0 0.0
        %929 = vmatprep.subr.mxu0 0.0
        %930 = vmatpush2.msra.mxu0 0.0
        %931 = vmatprep.subr.mxu0 0.0
        %932 = vmatpush2.msra.mxu0 0.0
        %933 = vmatprep.mubr.f32.mxu0 0.0
        %934 = vmatmul.mubr.f32.gmra.mxu0 %v864
        %v935 = vpop.f32.mrf.mxu0
        %v936 = vadd.f32 0.0, %v935
        %v937 = vpop.f32.mrf.mxu0
        %938 = vmatprep.mubr.f32.mxu0 0.0
        %939 = vmatmul.mubr.f32.gmra.mxu0 %v867
        %v940 = vpop.f32.mrf.mxu0
        %v941 = vadd.f32 0.0, %v940
        %v942 = vpop.f32.mrf.mxu0
        %943 = vdwg.mxu0
        %v945 = vsel %vm698, %v505, 0
        %v948 = vsel %vm698, %v506, 0
        %950 = vmatprep.subr.mxu0 0.0
        %951 = vmatpush1.msra.mxu0 0.0
        %952 = vmatprep.subr.mxu0 0.0
        %953 = vmatpush1.msra.mxu0 0.0
        %954 = vmatprep.subr.mxu0 0.0
        %955 = vmatpush1.msra.mxu0 0.0
        %956 = vmatprep.subr.mxu0 0.0
        %957 = vmatpush1.msra.mxu0 0.0
        %958 = vmatprep.subr.mxu0 0.0
        %959 = vmatpush1.msra.mxu0 0.0
        %960 = vmatprep.subr.mxu0 0.0
        %961 = vmatpush1.msra.mxu0 0.0
        %962 = vmatprep.subr.mxu0 0.0
        %963 = vmatpush1.msra.mxu0 0.0
        %964 = vmatprep.subr.mxu0 0.0
        %965 = vmatpush1.msra.mxu0 0.0
        %966 = vmatprep.subr.mxu0 0.0
        %967 = vmatpush1.msra.mxu0 0.0
        %968 = vmatprep.subr.mxu0 0.0
        %969 = vmatpush1.msra.mxu0 0.0
        %970 = vmatprep.subr.mxu0 0.0
        %971 = vmatpush1.msra.mxu0 0.0
        %972 = vmatprep.subr.mxu0 0.0
        %973 = vmatpush1.msra.mxu0 0.0
        %974 = vmatprep.subr.mxu0 0.0
        %975 = vmatpush1.msra.mxu0 %v693
        %976 = vmatprep.subr.mxu0 0.0
        %977 = vmatpush1.msra.mxu0 %v692
        %978 = vmatprep.subr.mxu0 0.0
        %979 = vmatpush1.msra.mxu0 %v691
        %980 = vmatprep.subr.mxu0 0.0
        %981 = vmatpush1.msra.mxu0 %v690
        %982 = vmatprep.subr.mxu0 0.0
        %983 = vmatpush2.msra.mxu0 0.0
        %984 = vmatprep.subr.mxu0 0.0
        %985 = vmatpush2.msra.mxu0 0.0
        %986 = vmatprep.subr.mxu0 0.0
        %987 = vmatpush2.msra.mxu0 0.0
        %988 = vmatprep.subr.mxu0 0.0
        %989 = vmatpush2.msra.mxu0 0.0
        %990 = vmatprep.subr.mxu0 0.0
        %991 = vmatpush2.msra.mxu0 0.0
        %992 = vmatprep.subr.mxu0 0.0
        %993 = vmatpush2.msra.mxu0 0.0
        %994 = vmatprep.subr.mxu0 0.0
        %995 = vmatpush2.msra.mxu0 0.0
        %996 = vmatprep.subr.mxu0 0.0
        %997 = vmatpush2.msra.mxu0 0.0
        %998 = vmatprep.subr.mxu0 0.0
        %999 = vmatpush2.msra.mxu0 0.0
        %1000 = vmatprep.subr.mxu0 0.0
        %1001 = vmatpush2.msra.mxu0 0.0
        %1002 = vmatprep.subr.mxu0 0.0
        %1003 = vmatpush2.msra.mxu0 0.0
        %1004 = vmatprep.subr.mxu0 0.0
        %1005 = vmatpush2.msra.mxu0 0.0
        %1006 = vmatprep.subr.mxu0 0.0
        %1007 = vmatpush2.msra.mxu0 0.0
        %1008 = vmatprep.subr.mxu0 0.0
        %1009 = vmatpush2.msra.mxu0 0.0
        %1010 = vmatprep.subr.mxu0 0.0
        %1011 = vmatpush2.msra.mxu0 0.0
        %1012 = vmatprep.subr.mxu0 0.0
        %1013 = vmatpush2.msra.mxu0 0.0
        %1014 = vmatprep.mubr.f32.mxu0 0.0
        %1015 = vmatmul.mubr.f32.gmra.mxu0 %v945
        %v1016 = vpop.f32.mrf.mxu0
        %v1017 = vadd.f32 %v936, %v1016
        %v1018 = vpop.f32.mrf.mxu0
        %1019 = vmatprep.mubr.f32.mxu0 0.0
        %1020 = vmatmul.mubr.f32.gmra.mxu0 %v948
        %v1021 = vpop.f32.mrf.mxu0
        %v1022 = vadd.f32 %v941, %v1021
        %v1023 = vpop.f32.mrf.mxu0
        %1024 = vdwg.mxu0
        %v1025 = vmax.f32 %v1017, 0.0
        %v1026 = vmax.f32 %v1022, 0.0
        %1027 = vst.msk [vmem:[%s500] sm:$0xff] %vm698, %v1025
        %1028 = vst.msk [vmem:[%s500 + $0x8] sm:$0xff] %vm698, %v1026
        %s1029 = sand.u32 %s196, 1
        %s1030 = scalar_lea.sflag [#allocation7], %s1029
        %s1031 = sand.u32 %s196, 1
        %s1032 = smul.addr %s1031, 16
        %s1033 = scalar_lea.vmem [#allocation6], %s1032
        // Predicated region
        $region204: #{tpu_custom_call.1} parent=186 // pred_check
          %p1034 = pneg %p206
        $region205: #{tpu_custom_call.1} parent=186 // pred_check_branch
          %1036 = sbr.rel (%p1034) target = $region207
        $region206: #{tpu_custom_call.1} parent=186 // pred_region
          %s1038 = ssub.s32 256, 256
          %1039 = vsyncadd %s1030, %s1038
          %s1040 = smul.addr %s21, 128
          %s1041 = scalar_lea.hbm %s7, %s1040
          %s1042 = sshll.u32 %s1033, 4
          %s1043 = int_to_ptr.vmem [resolvable:$true] %s1042
          %1048 = dma.vmem_to_hbm [thread:$0]  %s1043, 256, %s1041, %s1030, 128, 256, 8
        $region207: #{tpu_custom_call.1} parent=186 // pred_fallthru
          _
      $region187: #{tpu_custom_call.1} parent=5 // pred_fallthru
        _
      %p1049 = scmp.le.s32.totalorder 2, %s16
      // Predicated region
      $region208: #{tpu_custom_call.1} parent=5 // pred_check
        %p1050 = pneg %p1049
      $region209: #{tpu_custom_call.1} parent=5 // pred_check_branch
        %1052 = sbr.rel (%p1050) target = $region211
      $region210: #{tpu_custom_call.1} parent=5 // pred_region
        %s1053 = ssub.s32 %s16, 2
        // Predicated region
        $region212: #{tpu_custom_call.1} parent=210 // pred_check
          %p1054 = pneg %p212
        $region213: #{tpu_custom_call.1} parent=210 // pred_check_branch
          %1056 = sbr.rel (%p1054) target = $region215
        $region214: #{tpu_custom_call.1} parent=210 // pred_region
          %s1057 = sand.u32 %s197, 1
          %s1058 = scalar_lea.sflag [#allocation7], %s1057
          %s1059 = sand.u32 %s197, 1
          %s1060 = smul.addr %s1059, 16
          %s1061 = scalar_lea.vmem [#allocation6], %s1060
          %1062 = dma.done %s1058, 256
        $region215: #{tpu_custom_call.1} parent=210 // pred_fallthru
          _
      $region211: #{tpu_custom_call.1} parent=5 // pred_fallthru
        _
    $region6: #{tpu_custom_call.1} parent=1 // loop_footer
      %s20 = sadd.s32 1, %s16
    $region7: #{tpu_custom_call.1} parent=1 // loop_footer_branch
      %15 = sbr.rel target = $region3
    $region8: #{tpu_custom_call.1} parent=1 // loop_exit
      _
    %1063 = vsyncpa [#allocation7], 1
    %s1064 = scalar_lea.sflag [#allocation7], 1
    %1065 = vsyncpa %s1064, 1

</llo_original>
